<compile_context>
chip_gen: v6e
topology: v6e:2x2x1
jax: 0.10.0
libtpu: 0.0.40
codegen_flags: <defaults>
</compile_context>

<pallas_src>
import functools
import math

import jax
import jax.numpy as jnp
from jax.experimental import pallas as pl
from jax.experimental.pallas import tpu as pltpu


def _round_up(x, m):
    return ((x + m - 1) // m) * m


def _circular_conv_kernel(x_ref, w_ref, b_ref, o_ref, stack_ref,
                          *, K, Wp, L_pad, NB, Cin_pad):
    """Fused (circular-pad + conv-transpose + trim) for NB batch elements.

    x_ref     : (NB, Cin_pad, Lin)        wrap-padded input, spatially flattened
                                          with row stride Wp (zero tail).
    w_ref     : (Cout_pad, K*K*Cin_pad)   flipped/transposed weight matrix.
    b_ref     : (Cout_pad, 1)             bias column.
    o_ref     : (NB, Cout_pad, L_pad)     output in padded flattened layout
                                          (cols beyond W of each row / beyond
                                          H*Wp are garbage; wrapper trims).
    stack_ref : (K*K*Cin_pad, NB*L_pad)   VMEM scratch -- im2col stack.
    """
    # Stage the shifted-window stack: row block t*Cin_pad holds tap t of all
    # input channels, column block b*L_pad holds batch element b.  Destination
    # offsets are (8, 128)-aligned; the tap windows are cheap lane shifts of
    # the resident slab done exactly once each.
    for b in range(NB):
        for dy in range(K):
            for dx in range(K):
                t = dy * K + dx
                off = dy * Wp + dx
                stack_ref[t * Cin_pad:(t + 1) * Cin_pad,
                          b * L_pad:(b + 1) * L_pad] = x_ref[b, :, off:off + L_pad]

    # ONE MXU matmul: (Cout_pad, K*K*Cin_pad) @ (K*K*Cin_pad, NB*L_pad), f32 acc.
    y = jnp.dot(w_ref[...], stack_ref[...], preferred_element_type=jnp.float32)
    y = y + b_ref[...]                                   # bias broadcast

    # Lane-aligned (multiple-of-128) column splits back into per-batch planes.
    for b in range(NB):
        o_ref[b] = y[:, b * L_pad:(b + 1) * L_pad].astype(o_ref.dtype)


def conv_transpose2d_meta(x_nchw, weight, bias, *, kernel_size, stride=1):
    """Pallas implementation of ConvTranspose2d_meta.forward (fuc=0 path).

    x_nchw : (N, Cin, H, W)
    weight : (Cin, Cout, K, K)  -- PyTorch ConvTranspose2d weight layout
    bias   : (Cout,)
    returns: (N, Cout, H, W)
    """
    assert stride == 1, "only the default stride=1 configuration is implemented"
    assert kernel_size % 2 == 1, "centered periodic padding needs (k-1) even"

    N, Cin, H, W = x_nchw.shape
    K = kernel_size
    assert weight.shape[0] == Cin and weight.shape[2] == K and weight.shape[3] == K
    Cout = weight.shape[1]
    p = (K - 1) // 2
    Hp, Wp = H + K - 1, W + K - 1

    # Padded layout parameters (lane / sublane density).
    Cin_pad = _round_up(Cin, 8)
    Cout_pad = _round_up(Cout, 8)
    L_out = H * Wp                               # valid flattened output length
    L_pad = _round_up(L_out, 128)                # lane-dense column block
    max_off = (K - 1) * Wp + (K - 1)             # largest tap window offset
    Lin = _round_up(max_off + L_pad, 128)        # flattened padded slab length
    KKC = K * K * Cin_pad

    # Batch elements per grid step: widen matmul columns to ~1024 lanes.
    NB = max(1, min(N, 8, 1024 // L_pad))
    N_pad = _round_up(N, NB)
    grid = (N_pad // NB,)

    # --- glue (plain JAX): centered periodic padding == jnp.pad(mode="wrap"),
    # zero-pad batch/channels to padded sizes, flatten spatially (row stride
    # Wp) into a lane-dense slab with a zero tail. ---
    x_wrap = jnp.pad(x_nchw, ((0, 0), (0, 0), (p, p), (p, p)), mode="wrap")
    x_wrap = jnp.pad(x_wrap, ((0, N_pad - N), (0, Cin_pad - Cin), (0, 0), (0, 0)))
    x_flat = x_wrap.reshape(N_pad, Cin_pad, Hp * Wp)
    x_flat = jnp.pad(x_flat, ((0, 0), (0, 0), (0, Lin - Hp * Wp)))

    # ConvTranspose2d(stride=1, padding=(K-1)//2) followed by the trim is a
    # VALID cross-correlation of the wrap-padded input with the flipped weight,
    # with (in, out) channel axes swapped.
    #   w_taps[dy*K+dx, o, c] = weight[c, o, K-1-dy, K-1-dx]
    w_taps = jnp.transpose(weight[:, :, ::-1, ::-1], (2, 3, 1, 0))  # (K,K,Cout,Cin)
    w_taps = w_taps.reshape(K * K, Cout, Cin)
    w_taps = jnp.pad(w_taps, ((0, 0), (0, Cout_pad - Cout), (0, Cin_pad - Cin)))
    # Row order of the im2col stack is [tap, channel] => (Cout_pad, K*K*Cin_pad).
    w_mat = jnp.transpose(w_taps, (1, 0, 2)).reshape(Cout_pad, KKC).astype(jnp.float32)
    b_col = jnp.pad(bias, (0, Cout_pad - Cout)).reshape(Cout_pad, 1).astype(jnp.float32)

    kernel = functools.partial(_circular_conv_kernel,
                               K=K, Wp=Wp, L_pad=L_pad, NB=NB, Cin_pad=Cin_pad)

    out_wide = pl.pallas_call(
        kernel,
        out_shape=jax.ShapeDtypeStruct((N_pad, Cout_pad, L_pad), x_nchw.dtype),
        grid_spec=pltpu.PrefetchScalarGridSpec(
            num_scalar_prefetch=0,
            grid=grid,
            in_specs=[
                pl.BlockSpec((NB, Cin_pad, Lin), lambda g: (g, 0, 0)),
                pl.BlockSpec((Cout_pad, KKC), lambda g: (0, 0)),
                pl.BlockSpec((Cout_pad, 1), lambda g: (0, 0)),
            ],
            out_specs=pl.BlockSpec((NB, Cout_pad, L_pad), lambda g: (g, 0, 0)),
            scratch_shapes=[pltpu.VMEM((KKC, NB * L_pad), x_flat.dtype)],
        ),
        compiler_params=pltpu.CompilerParams(
            dimension_semantics=("parallel",)),
    )(x_flat, w_mat, b_col)

    # Trim padded channels/columns, un-flatten (row stride Wp), drop Wp-W cols.
    out = out_wide[:N, :Cout, :L_out].reshape(N, Cout, H, Wp)[:, :, :, :W]
    return out


def _reference_jax(x_nchw, weight, bias, K):
    """Pure-JAX reference (same math, XLA conv) for correctness checking."""
    p = (K - 1) // 2
    xp = jnp.pad(x_nchw, ((0, 0), (0, 0), (p, p), (p, p)), mode="wrap")
    w_oihw = jnp.transpose(weight[:, :, ::-1, ::-1], (1, 0, 2, 3))
    y = jax.lax.conv_general_dilated(
        xp, w_oihw, window_strides=(1, 1), padding="VALID",
        dimension_numbers=("NCHW", "OIHW", "NCHW"))
    return y + bias[None, :, None, None]


if __name__ == "__main__":
    key = jax.random.PRNGKey(0)
    k_x, k_w, k_b = jax.random.split(key, 3)

    # Small shapes consistent with the module's forward (NCHW input).
    N, Cin, Cout, H, W, K = 2, 4, 8, 16, 16, 3

    x = jax.random.normal(k_x, (N, Cin, H, W), dtype=jnp.float32)
    # nn.ConvTranspose2d weight: (in_channels, out_channels/groups, kH, kW)
    fan_in = Cin * K * K
    weight = jax.random.normal(k_w, (Cin, Cout, K, K), dtype=jnp.float32) / math.sqrt(fan_in)
    bias = 0.1 * jax.random.normal(k_b, (Cout,), dtype=jnp.float32)

    out = conv_transpose2d_meta(x, weight, bias, kernel_size=K, stride=1)
    out = jax.block_until_ready(out)

    ref = _reference_jax(x, weight, bias, K)
    assert out.shape == (N, Cout, H, W), out.shape
    assert jnp.allclose(out, ref, atol=1e-4, rtol=1e-4), "mismatch vs JAX reference"

    print("KERNEL_OK")
</pallas_src>

<mosaic_0001>
module attributes {stable_mosaic.version = 11 : i64} {
  func.func @_circular_conv_kernel(%arg0: i32, %arg1: memref<2x8x512xf32, #tpu.memory_space<vmem>>, %arg2: memref<8x72xf32, #tpu.memory_space<vmem>>, %arg3: memref<8x1xf32, #tpu.memory_space<vmem>>, %arg4: memref<2x8x384xf32, #tpu.memory_space<vmem>>, %arg5: memref<72x768xf32, #tpu.memory_space<vmem>>) attributes {dimension_semantics = [#tpu.dimension_semantics<parallel>], iteration_bounds = array<i64: 1>, scalar_prefetch = 0 : i64, scratch_operands = 1 : i64, tpu.core_type = #tpu.core_type<tc>, window_params = [{transform_indices = @transform_0, window_bounds = array<i64: 2, 8, 512>}, {pipeline_mode = #tpu.pipeline_mode<synchronous>, transform_indices = @transform_1, window_bounds = array<i64: 8, 72>}, {pipeline_mode = #tpu.pipeline_mode<synchronous>, transform_indices = @transform_2, window_bounds = array<i64: 8, 1>}, {transform_indices = @transform_3, window_bounds = array<i64: 2, 8, 384>}]} {
    %c0 = arith.constant 0 : index
    %c0_0 = arith.constant 0 : index
    %c0_1 = arith.constant 0 : index
    %0 = vector.load %arg1[%c0, %c0_0, %c0_1] : memref<2x8x512xf32, #tpu.memory_space<vmem>>, vector<1x8x384xf32>
    %1 = vector.shape_cast %0 : vector<1x8x384xf32> to vector<8x384xf32>
    %c0_2 = arith.constant 0 : index
    %c0_3 = arith.constant 0 : index
    %2 = vector.load %arg5[%c0_2, %c0_3] : memref<72x768xf32, #tpu.memory_space<vmem>>, vector<8x384xf32>
    tpu.vector_store %arg5[%c0_2, %c0_3], %1 {strides = array<i32>} : memref<72x768xf32, #tpu.memory_space<vmem>>, vector<8x384xf32>,
    %c0_4 = arith.constant 0 : index
    %c0_5 = arith.constant 0 : index
    %c1 = arith.constant 1 : index
    %3 = vector.load %arg1[%c0_4, %c0_5, %c1] : memref<2x8x512xf32, #tpu.memory_space<vmem>>, vector<1x8x384xf32>
    %4 = vector.shape_cast %3 : vector<1x8x384xf32> to vector<8x384xf32>
    %c8 = arith.constant 8 : index
    %c0_6 = arith.constant 0 : index
    %5 = vector.load %arg5[%c8, %c0_6] : memref<72x768xf32, #tpu.memory_space<vmem>>, vector<8x384xf32>
    tpu.vector_store %arg5[%c8, %c0_6], %4 {strides = array<i32>} : memref<72x768xf32, #tpu.memory_space<vmem>>, vector<8x384xf32>,
    %c0_7 = arith.constant 0 : index
    %c0_8 = arith.constant 0 : index
    %c2 = arith.constant 2 : index
    %6 = vector.load %arg1[%c0_7, %c0_8, %c2] : memref<2x8x512xf32, #tpu.memory_space<vmem>>, vector<1x8x384xf32>
    %7 = vector.shape_cast %6 : vector<1x8x384xf32> to vector<8x384xf32>
    %c16 = arith.constant 16 : index
    %c0_9 = arith.constant 0 : index
    %8 = vector.load %arg5[%c16, %c0_9] : memref<72x768xf32, #tpu.memory_space<vmem>>, vector<8x384xf32>
    tpu.vector_store %arg5[%c16, %c0_9], %7 {strides = array<i32>} : memref<72x768xf32, #tpu.memory_space<vmem>>, vector<8x384xf32>,
    %c0_10 = arith.constant 0 : index
    %c0_11 = arith.constant 0 : index
    %c18 = arith.constant 18 : index
    %9 = vector.load %arg1[%c0_10, %c0_11, %c18] : memref<2x8x512xf32, #tpu.memory_space<vmem>>, vector<1x8x384xf32>
    %10 = vector.shape_cast %9 : vector<1x8x384xf32> to vector<8x384xf32>
    %c24 = arith.constant 24 : index
    %c0_12 = arith.constant 0 : index
    %11 = vector.load %arg5[%c24, %c0_12] : memref<72x768xf32, #tpu.memory_space<vmem>>, vector<8x384xf32>
    tpu.vector_store %arg5[%c24, %c0_12], %10 {strides = array<i32>} : memref<72x768xf32, #tpu.memory_space<vmem>>, vector<8x384xf32>,
    %c0_13 = arith.constant 0 : index
    %c0_14 = arith.constant 0 : index
    %c19 = arith.constant 19 : index
    %12 = vector.load %arg1[%c0_13, %c0_14, %c19] : memref<2x8x512xf32, #tpu.memory_space<vmem>>, vector<1x8x384xf32>
    %13 = vector.shape_cast %12 : vector<1x8x384xf32> to vector<8x384xf32>
    %c32 = arith.constant 32 : index
    %c0_15 = arith.constant 0 : index
    %14 = vector.load %arg5[%c32, %c0_15] : memref<72x768xf32, #tpu.memory_space<vmem>>, vector<8x384xf32>
    tpu.vector_store %arg5[%c32, %c0_15], %13 {strides = array<i32>} : memref<72x768xf32, #tpu.memory_space<vmem>>, vector<8x384xf32>,
    %c0_16 = arith.constant 0 : index
    %c0_17 = arith.constant 0 : index
    %c20 = arith.constant 20 : index
    %15 = vector.load %arg1[%c0_16, %c0_17, %c20] : memref<2x8x512xf32, #tpu.memory_space<vmem>>, vector<1x8x384xf32>
    %16 = vector.shape_cast %15 : vector<1x8x384xf32> to vector<8x384xf32>
    %c40 = arith.constant 40 : index
    %c0_18 = arith.constant 0 : index
    %17 = vector.load %arg5[%c40, %c0_18] : memref<72x768xf32, #tpu.memory_space<vmem>>, vector<8x384xf32>
    tpu.vector_store %arg5[%c40, %c0_18], %16 {strides = array<i32>} : memref<72x768xf32, #tpu.memory_space<vmem>>, vector<8x384xf32>,
    %c0_19 = arith.constant 0 : index
    %c0_20 = arith.constant 0 : index
    %c36 = arith.constant 36 : index
    %18 = vector.load %arg1[%c0_19, %c0_20, %c36] : memref<2x8x512xf32, #tpu.memory_space<vmem>>, vector<1x8x384xf32>
    %19 = vector.shape_cast %18 : vector<1x8x384xf32> to vector<8x384xf32>
    %c48 = arith.constant 48 : index
    %c0_21 = arith.constant 0 : index
    %20 = vector.load %arg5[%c48, %c0_21] : memref<72x768xf32, #tpu.memory_space<vmem>>, vector<8x384xf32>
    tpu.vector_store %arg5[%c48, %c0_21], %19 {strides = array<i32>} : memref<72x768xf32, #tpu.memory_space<vmem>>, vector<8x384xf32>,
    %c0_22 = arith.constant 0 : index
    %c0_23 = arith.constant 0 : index
    %c37 = arith.constant 37 : index
    %21 = vector.load %arg1[%c0_22, %c0_23, %c37] : memref<2x8x512xf32, #tpu.memory_space<vmem>>, vector<1x8x384xf32>
    %22 = vector.shape_cast %21 : vector<1x8x384xf32> to vector<8x384xf32>
    %c56 = arith.constant 56 : index
    %c0_24 = arith.constant 0 : index
    %23 = vector.load %arg5[%c56, %c0_24] : memref<72x768xf32, #tpu.memory_space<vmem>>, vector<8x384xf32>
    tpu.vector_store %arg5[%c56, %c0_24], %22 {strides = array<i32>} : memref<72x768xf32, #tpu.memory_space<vmem>>, vector<8x384xf32>,
    %c0_25 = arith.constant 0 : index
    %c0_26 = arith.constant 0 : index
    %c38 = arith.constant 38 : index
    %24 = vector.load %arg1[%c0_25, %c0_26, %c38] : memref<2x8x512xf32, #tpu.memory_space<vmem>>, vector<1x8x384xf32>
    %25 = vector.shape_cast %24 : vector<1x8x384xf32> to vector<8x384xf32>
    %c64 = arith.constant 64 : index
    %c0_27 = arith.constant 0 : index
    %26 = vector.load %arg5[%c64, %c0_27] : memref<72x768xf32, #tpu.memory_space<vmem>>, vector<8x384xf32>
    tpu.vector_store %arg5[%c64, %c0_27], %25 {strides = array<i32>} : memref<72x768xf32, #tpu.memory_space<vmem>>, vector<8x384xf32>,
    %c1_28 = arith.constant 1 : index
    %c0_29 = arith.constant 0 : index
    %c0_30 = arith.constant 0 : index
    %27 = vector.load %arg1[%c1_28, %c0_29, %c0_30] : memref<2x8x512xf32, #tpu.memory_space<vmem>>, vector<1x8x384xf32>
    %28 = vector.shape_cast %27 : vector<1x8x384xf32> to vector<8x384xf32>
    %c0_31 = arith.constant 0 : index
    %c384 = arith.constant 384 : index
    %29 = vector.load %arg5[%c0_31, %c384] : memref<72x768xf32, #tpu.memory_space<vmem>>, vector<8x384xf32>
    tpu.vector_store %arg5[%c0_31, %c384], %28 {strides = array<i32>} : memref<72x768xf32, #tpu.memory_space<vmem>>, vector<8x384xf32>,
    %c1_32 = arith.constant 1 : index
    %c0_33 = arith.constant 0 : index
    %c1_34 = arith.constant 1 : index
    %30 = vector.load %arg1[%c1_32, %c0_33, %c1_34] : memref<2x8x512xf32, #tpu.memory_space<vmem>>, vector<1x8x384xf32>
    %31 = vector.shape_cast %30 : vector<1x8x384xf32> to vector<8x384xf32>
    %c8_35 = arith.constant 8 : index
    %c384_36 = arith.constant 384 : index
    %32 = vector.load %arg5[%c8_35, %c384_36] : memref<72x768xf32, #tpu.memory_space<vmem>>, vector<8x384xf32>
    tpu.vector_store %arg5[%c8_35, %c384_36], %31 {strides = array<i32>} : memref<72x768xf32, #tpu.memory_space<vmem>>, vector<8x384xf32>,
    %c1_37 = arith.constant 1 : index
    %c0_38 = arith.constant 0 : index
    %c2_39 = arith.constant 2 : index
    %33 = vector.load %arg1[%c1_37, %c0_38, %c2_39] : memref<2x8x512xf32, #tpu.memory_space<vmem>>, vector<1x8x384xf32>
    %34 = vector.shape_cast %33 : vector<1x8x384xf32> to vector<8x384xf32>
    %c16_40 = arith.constant 16 : index
    %c384_41 = arith.constant 384 : index
    %35 = vector.load %arg5[%c16_40, %c384_41] : memref<72x768xf32, #tpu.memory_space<vmem>>, vector<8x384xf32>
    tpu.vector_store %arg5[%c16_40, %c384_41], %34 {strides = array<i32>} : memref<72x768xf32, #tpu.memory_space<vmem>>, vector<8x384xf32>,
    %c1_42 = arith.constant 1 : index
    %c0_43 = arith.constant 0 : index
    %c18_44 = arith.constant 18 : index
    %36 = vector.load %arg1[%c1_42, %c0_43, %c18_44] : memref<2x8x512xf32, #tpu.memory_space<vmem>>, vector<1x8x384xf32>
    %37 = vector.shape_cast %36 : vector<1x8x384xf32> to vector<8x384xf32>
    %c24_45 = arith.constant 24 : index
    %c384_46 = arith.constant 384 : index
    %38 = vector.load %arg5[%c24_45, %c384_46] : memref<72x768xf32, #tpu.memory_space<vmem>>, vector<8x384xf32>
    tpu.vector_store %arg5[%c24_45, %c384_46], %37 {strides = array<i32>} : memref<72x768xf32, #tpu.memory_space<vmem>>, vector<8x384xf32>,
    %c1_47 = arith.constant 1 : index
    %c0_48 = arith.constant 0 : index
    %c19_49 = arith.constant 19 : index
    %39 = vector.load %arg1[%c1_47, %c0_48, %c19_49] : memref<2x8x512xf32, #tpu.memory_space<vmem>>, vector<1x8x384xf32>
    %40 = vector.shape_cast %39 : vector<1x8x384xf32> to vector<8x384xf32>
    %c32_50 = arith.constant 32 : index
    %c384_51 = arith.constant 384 : index
    %41 = vector.load %arg5[%c32_50, %c384_51] : memref<72x768xf32, #tpu.memory_space<vmem>>, vector<8x384xf32>
    tpu.vector_store %arg5[%c32_50, %c384_51], %40 {strides = array<i32>} : memref<72x768xf32, #tpu.memory_space<vmem>>, vector<8x384xf32>,
    %c1_52 = arith.constant 1 : index
    %c0_53 = arith.constant 0 : index
    %c20_54 = arith.constant 20 : index
    %42 = vector.load %arg1[%c1_52, %c0_53, %c20_54] : memref<2x8x512xf32, #tpu.memory_space<vmem>>, vector<1x8x384xf32>
    %43 = vector.shape_cast %42 : vector<1x8x384xf32> to vector<8x384xf32>
    %c40_55 = arith.constant 40 : index
    %c384_56 = arith.constant 384 : index
    %44 = vector.load %arg5[%c40_55, %c384_56] : memref<72x768xf32, #tpu.memory_space<vmem>>, vector<8x384xf32>
    tpu.vector_store %arg5[%c40_55, %c384_56], %43 {strides = array<i32>} : memref<72x768xf32, #tpu.memory_space<vmem>>, vector<8x384xf32>,
    %c1_57 = arith.constant 1 : index
    %c0_58 = arith.constant 0 : index
    %c36_59 = arith.constant 36 : index
    %45 = vector.load %arg1[%c1_57, %c0_58, %c36_59] : memref<2x8x512xf32, #tpu.memory_space<vmem>>, vector<1x8x384xf32>
    %46 = vector.shape_cast %45 : vector<1x8x384xf32> to vector<8x384xf32>
    %c48_60 = arith.constant 48 : index
    %c384_61 = arith.constant 384 : index
    %47 = vector.load %arg5[%c48_60, %c384_61] : memref<72x768xf32, #tpu.memory_space<vmem>>, vector<8x384xf32>
    tpu.vector_store %arg5[%c48_60, %c384_61], %46 {strides = array<i32>} : memref<72x768xf32, #tpu.memory_space<vmem>>, vector<8x384xf32>,
    %c1_62 = arith.constant 1 : index
    %c0_63 = arith.constant 0 : index
    %c37_64 = arith.constant 37 : index
    %48 = vector.load %arg1[%c1_62, %c0_63, %c37_64] : memref<2x8x512xf32, #tpu.memory_space<vmem>>, vector<1x8x384xf32>
    %49 = vector.shape_cast %48 : vector<1x8x384xf32> to vector<8x384xf32>
    %c56_65 = arith.constant 56 : index
    %c384_66 = arith.constant 384 : index
    %50 = vector.load %arg5[%c56_65, %c384_66] : memref<72x768xf32, #tpu.memory_space<vmem>>, vector<8x384xf32>
    tpu.vector_store %arg5[%c56_65, %c384_66], %49 {strides = array<i32>} : memref<72x768xf32, #tpu.memory_space<vmem>>, vector<8x384xf32>,
    %c1_67 = arith.constant 1 : index
    %c0_68 = arith.constant 0 : index
    %c38_69 = arith.constant 38 : index
    %51 = vector.load %arg1[%c1_67, %c0_68, %c38_69] : memref<2x8x512xf32, #tpu.memory_space<vmem>>, vector<1x8x384xf32>
    %52 = vector.shape_cast %51 : vector<1x8x384xf32> to vector<8x384xf32>
    %c64_70 = arith.constant 64 : index
    %c384_71 = arith.constant 384 : index
    %53 = vector.load %arg5[%c64_70, %c384_71] : memref<72x768xf32, #tpu.memory_space<vmem>>, vector<8x384xf32>
    tpu.vector_store %arg5[%c64_70, %c384_71], %52 {strides = array<i32>} : memref<72x768xf32, #tpu.memory_space<vmem>>, vector<8x384xf32>,
    %c0_72 = arith.constant 0 : index
    %c0_73 = arith.constant 0 : index
    %54 = vector.load %arg2[%c0_72, %c0_73] : memref<8x72xf32, #tpu.memory_space<vmem>>, vector<8x72xf32>
    %c0_74 = arith.constant 0 : index
    %c0_75 = arith.constant 0 : index
    %55 = vector.load %arg5[%c0_74, %c0_75] : memref<72x768xf32, #tpu.memory_space<vmem>>, vector<72x768xf32>
    %cst = arith.constant dense<0.000000e+00> : vector<8x768xf32>
    %56 = tpu.matmul %54, %55, %cst {dimension_numbers = #tpu.dot_dimension_numbers<[1], [0], [0], [1], [0, 0, 1, 1], [], []>} : vector<8x72xf32>, vector<72x768xf32>, vector<8x768xf32> -> vector<8x768xf32>
    %c0_76 = arith.constant 0 : index
    %c0_77 = arith.constant 0 : index
    %57 = vector.load %arg3[%c0_76, %c0_77] : memref<8x1xf32, #tpu.memory_space<vmem>>, vector<8x1xf32>
    %58 = vector.broadcast %57 : vector<8x1xf32> to vector<8x768xf32>
    %59 = arith.addf %56, %58 : vector<8x768xf32>
    %60 = vector.extract_strided_slice %59 {offsets = [0, 0], sizes = [8, 384], strides = [1, 1]} : vector<8x768xf32> to vector<8x384xf32>
    %c0_78 = arith.constant 0 : index
    %c0_79 = arith.constant 0 : index
    %c0_80 = arith.constant 0 : index
    %61 = vector.load %arg4[%c0_78, %c0_79, %c0_80] : memref<2x8x384xf32, #tpu.memory_space<vmem>>, vector<1x8x384xf32>
    %62 = vector.shape_cast %61 : vector<1x8x384xf32> to vector<8x384xf32>
    %63 = vector.shape_cast %60 : vector<8x384xf32> to vector<1x8x384xf32>
    tpu.vector_store %arg4[%c0_78, %c0_79, %c0_80], %63 {strides = array<i32>} : memref<2x8x384xf32, #tpu.memory_space<vmem>>, vector<1x8x384xf32>,
    %64 = vector.extract_strided_slice %59 {offsets = [0, 384], sizes = [8, 384], strides = [1, 1]} : vector<8x768xf32> to vector<8x384xf32>
    %c1_81 = arith.constant 1 : index
    %c0_82 = arith.constant 0 : index
    %c0_83 = arith.constant 0 : index
    %65 = vector.load %arg4[%c1_81, %c0_82, %c0_83] : memref<2x8x384xf32, #tpu.memory_space<vmem>>, vector<1x8x384xf32>
    %66 = vector.shape_cast %65 : vector<1x8x384xf32> to vector<8x384xf32>
    %67 = vector.shape_cast %64 : vector<8x384xf32> to vector<1x8x384xf32>
    tpu.vector_store %arg4[%c1_81, %c0_82, %c0_83], %67 {strides = array<i32>} : memref<2x8x384xf32, #tpu.memory_space<vmem>>, vector<1x8x384xf32>,
    return
  }
  func.func @transform_0(%arg0: i32) -> (i32, i32, i32) {
    %c0_i32 = arith.constant 0 : i32
    %c0_i32_0 = arith.constant 0 : i32
    %c0_i32_1 = arith.constant 0 : i32
    return %arg0, %c0_i32, %c0_i32_0 : i32, i32, i32
  }
  func.func @transform_1(%arg0: i32) -> (i32, i32) {
    %c0_i32 = arith.constant 0 : i32
    %c0_i32_0 = arith.constant 0 : i32
    %c0_i32_1 = arith.constant 0 : i32
    return %c0_i32, %c0_i32_0 : i32, i32
  }
  func.func @transform_2(%arg0: i32) -> (i32, i32) {
    %c0_i32 = arith.constant 0 : i32
    %c0_i32_0 = arith.constant 0 : i32
    %c0_i32_1 = arith.constant 0 : i32
    return %c0_i32, %c0_i32_0 : i32, i32
  }
  func.func @transform_3(%arg0: i32) -> (i32, i32, i32) {
    %c0_i32 = arith.constant 0 : i32
    %c0_i32_0 = arith.constant 0 : i32
    %c0_i32_1 = arith.constant 0 : i32
    return %arg0, %c0_i32, %c0_i32_0 : i32, i32, i32
  }
}

</mosaic_0001>

<llo_original>
// kernel: tpu_custom_call.1
$region0: #{tpu_custom_call.1}
  #allocation0 [shape = 'u32[]', space=smem, size = 0x4, offset = 0x4, fixed_abs, tag = 'smem constant byte address 0x4 - core index']
  #allocation1 [shape = 'u32[144,128]{1,0:T(1,128)}', space=vmem, size = 0x12000, scoped, tag = 'internal scratch']
  #allocation2 [shape = 'f32[72,768]{1,0:T(8,128)}', space=vmem, size = 0x36000, scoped, tag = 'scratch operand']
  %s0 = inlined_call_operand.hbm [shape: f32[2,8,512], index: 0, kind: input, shape index: {}]
  %s1 = inlined_call_operand.vmem [shape: f32[8,72], index: 1, kind: input, shape index: {}]
  %s2 = inlined_call_operand.vmem [shape: f32[8,1], index: 2, kind: input, shape index: {}]
  %s3 = inlined_call_operand.hbm [shape: f32[2,8,384], index: 3, kind: output, shape index: {}]
  %s4 = sld [smem:[#allocation0]]
  $region26: #{tpu_custom_call.1} parent=0
    _
  %s6 = ssub.s32 1, %s4
  %s7 = scalar_select 0, %s6, %s4
  $region1: #{tpu_custom_call.1} parent=0
    #allocation3 [shape = 'u8[32768]{0}', space=vmem, size = 0x8000, scoped, tag = 'input window, operand 0, single buffered']
    #allocation4 [shape = 's32[1]{0}', space=sflag, size = 0x4, scoped, tag = 'scoped memory for tpu_custom_call.1']
    #allocation5 [shape = 's32[1]{0}', space=sflag, size = 0x4, scoped, tag = 'scoped memory for tpu_custom_call.1']
    #allocation6 [shape = 'u8[24576]{0}', space=vmem, size = 0x6000, scoped, tag = 'output window, operand 0, single buffered']
    %8 = vsyncpa [#allocation4], 0
    %9 = vsyncpa [#allocation5], 0
    // Predicated region
    $region2: #{tpu_custom_call.1} parent=1 // pred_check
      _
    $region3: #{tpu_custom_call.1} parent=1 // pred_check_branch
      %11 = sbr.rel (0) target = $region5
    $region4: #{tpu_custom_call.1} parent=1 // pred_region
      %s13 = ssub.s32 1024, 1024
      %14 = vsyncadd [#allocation4], %s13
      %s15 = sshll.u32 [#allocation3], 4
      %s16 = int_to_ptr.vmem [resolvable:$true] %s15
      %21 = dma.hbm_to_vmem [thread:$0]  %s0, 1024, %s16, [#allocation4], 512, 512, 32
    $region5: #{tpu_custom_call.1} parent=1 // pred_fallthru
      _
    // Predicated region
    $region6: #{tpu_custom_call.1} parent=1 // pred_check
      _
    $region7: #{tpu_custom_call.1} parent=1 // pred_check_branch
      %23 = sbr.rel (0) target = $region9
    $region8: #{tpu_custom_call.1} parent=1 // pred_region
      _
    $region9: #{tpu_custom_call.1} parent=1 // pred_fallthru
      _
    // Predicated region
    $region10: #{tpu_custom_call.1} parent=1 // pred_check
      _
    $region11: #{tpu_custom_call.1} parent=1 // pred_check_branch
      %25 = sbr.rel (0) target = $region13
    $region12: #{tpu_custom_call.1} parent=1 // pred_region
      _
    $region13: #{tpu_custom_call.1} parent=1 // pred_fallthru
      _
    // Predicated region
    $region14: #{tpu_custom_call.1} parent=1 // pred_check
      _
    $region15: #{tpu_custom_call.1} parent=1 // pred_check_branch
      %27 = sbr.rel (0) target = $region17
    $region16: #{tpu_custom_call.1} parent=1 // pred_region
      %28 = dma.done [#allocation4], 1024
    $region17: #{tpu_custom_call.1} parent=1 // pred_fallthru
      _
    %v29 = vld [vmem:[#allocation3] sm:$0xff]
    %v30 = vld [vmem:[#allocation3 + $0x8] sm:$0xff]
    %v31 = vld [vmem:[#allocation3 + $0x10] sm:$0xff]
    %32 = vst [vmem:[#allocation2] sm:$0xff] %v29
    %33 = vst [vmem:[#allocation2 + $0x8] sm:$0xff] %v30
    %34 = vst [vmem:[#allocation2 + $0x10] sm:$0xff] %v31
    %v35 = vld [vmem:[#allocation3] sm:$0xff]
    %v36 = vld [vmem:[#allocation3 + $0x8] sm:$0xff]
    %v37 = vld [vmem:[#allocation3 + $0x10] sm:$0xff]
    %v38 = vld [vmem:[#allocation3 + $0x18] sm:$0xff]
    %43 = vrot.lane.b32.xlu0 %v35, 127
    %v44 = vpop.permute.xlu0 %43
    %45 = vrot.lane.b32.xlu0 %v36, 127
    %v46 = vpop.permute.xlu0 %45
    %47 = vrot.lane.b32.xlu0 %v37, 127
    %v48 = vpop.permute.xlu0 %47
    %49 = vrot.lane.b32.xlu0 %v38, 127
    %v50 = vpop.permute.xlu0 %49
    %vm51 = vcmask 1039360
    %v52 = vsel %vm51, %v44, %v46
    %v53 = vsel %vm51, %v46, %v48
    %v54 = vsel %vm51, %v48, %v50
    %58 = vst [vmem:[#allocation2 + $0x30] sm:$0xff] %v52
    %59 = vst [vmem:[#allocation2 + $0x38] sm:$0xff] %v53
    %60 = vst [vmem:[#allocation2 + $0x40] sm:$0xff] %v54
    %v61 = vld [vmem:[#allocation3] sm:$0xff]
    %v62 = vld [vmem:[#allocation3 + $0x8] sm:$0xff]
    %v63 = vld [vmem:[#allocation3 + $0x10] sm:$0xff]
    %v64 = vld [vmem:[#allocation3 + $0x18] sm:$0xff]
    %69 = vrot.lane.b32.xlu0 %v61, 126
    %v70 = vpop.permute.xlu0 %69
    %71 = vrot.lane.b32.xlu0 %v62, 126
    %v72 = vpop.permute.xlu0 %71
    %73 = vrot.lane.b32.xlu0 %v63, 126
    %v74 = vpop.permute.xlu0 %73
    %75 = vrot.lane.b32.xlu0 %v64, 126
    %v76 = vpop.permute.xlu0 %75
    %vm77 = vcmask 1031168
    %v78 = vsel %vm77, %v70, %v72
    %v79 = vsel %vm77, %v72, %v74
    %v80 = vsel %vm77, %v74, %v76
    %84 = vst [vmem:[#allocation2 + $0x60] sm:$0xff] %v78
    %85 = vst [vmem:[#allocation2 + $0x68] sm:$0xff] %v79
    %86 = vst [vmem:[#allocation2 + $0x70] sm:$0xff] %v80
    %v87 = vld [vmem:[#allocation3] sm:$0xff]
    %v88 = vld [vmem:[#allocation3 + $0x8] sm:$0xff]
    %v89 = vld [vmem:[#allocation3 + $0x10] sm:$0xff]
    %v90 = vld [vmem:[#allocation3 + $0x18] sm:$0xff]
    %95 = vrot.lane.b32.xlu0 %v87, 110
    %v96 = vpop.permute.xlu0 %95
    %97 = vrot.lane.b32.xlu0 %v88, 110
    %v98 = vpop.permute.xlu0 %97
    %99 = vrot.lane.b32.xlu0 %v89, 110
    %v100 = vpop.permute.xlu0 %99
    %101 = vrot.lane.b32.xlu0 %v90, 110
    %v102 = vpop.permute.xlu0 %101
    %vm103 = vcmask 900096
    %v104 = vsel %vm103, %v96, %v98
    %v105 = vsel %vm103, %v98, %v100
    %v106 = vsel %vm103, %v100, %v102
    %110 = vst [vmem:[#allocation2 + $0x90] sm:$0xff] %v104
    %111 = vst [vmem:[#allocation2 + $0x98] sm:$0xff] %v105
    %112 = vst [vmem:[#allocation2 + $0xa0] sm:$0xff] %v106
    %v113 = vld [vmem:[#allocation3] sm:$0xff]
    %v114 = vld [vmem:[#allocation3 + $0x8] sm:$0xff]
    %v115 = vld [vmem:[#allocation3 + $0x10] sm:$0xff]
    %v116 = vld [vmem:[#allocation3 + $0x18] sm:$0xff]
    %121 = vrot.lane.b32.xlu0 %v113, 109
    %v122 = vpop.permute.xlu0 %121
    %123 = vrot.lane.b32.xlu0 %v114, 109
    %v124 = vpop.permute.xlu0 %123
    %125 = vrot.lane.b32.xlu0 %v115, 109
    %v126 = vpop.permute.xlu0 %125
    %127 = vrot.lane.b32.xlu0 %v116, 109
    %v128 = vpop.permute.xlu0 %127
    %vm129 = vcmask 891904
    %v130 = vsel %vm129, %v122, %v124
    %v131 = vsel %vm129, %v124, %v126
    %v132 = vsel %vm129, %v126, %v128
    %136 = vst [vmem:[#allocation2 + $0xc0] sm:$0xff] %v130
    %137 = vst [vmem:[#allocation2 + $0xc8] sm:$0xff] %v131
    %138 = vst [vmem:[#allocation2 + $0xd0] sm:$0xff] %v132
    %v139 = vld [vmem:[#allocation3] sm:$0xff]
    %v140 = vld [vmem:[#allocation3 + $0x8] sm:$0xff]
    %v141 = vld [vmem:[#allocation3 + $0x10] sm:$0xff]
    %v142 = vld [vmem:[#allocation3 + $0x18] sm:$0xff]
    %147 = vrot.lane.b32.xlu0 %v139, 108
    %v148 = vpop.permute.xlu0 %147
    %149 = vrot.lane.b32.xlu0 %v140, 108
    %v150 = vpop.permute.xlu0 %149
    %151 = vrot.lane.b32.xlu0 %v141, 108
    %v152 = vpop.permute.xlu0 %151
    %153 = vrot.lane.b32.xlu0 %v142, 108
    %v154 = vpop.permute.xlu0 %153
    %vm155 = vcmask 883712
    %v156 = vsel %vm155, %v148, %v150
    %v157 = vsel %vm155, %v150, %v152
    %v158 = vsel %vm155, %v152, %v154
    %162 = vst [vmem:[#allocation2 + $0xf0] sm:$0xff] %v156
    %163 = vst [vmem:[#allocation2 + $0xf8] sm:$0xff] %v157
    %164 = vst [vmem:[#allocation2 + $0x100] sm:$0xff] %v158
    %v165 = vld [vmem:[#allocation3] sm:$0xff]
    %v166 = vld [vmem:[#allocation3 + $0x8] sm:$0xff]
    %v167 = vld [vmem:[#allocation3 + $0x10] sm:$0xff]
    %v168 = vld [vmem:[#allocation3 + $0x18] sm:$0xff]
    %173 = vrot.lane.b32.xlu0 %v165, 92
    %v174 = vpop.permute.xlu0 %173
    %175 = vrot.lane.b32.xlu0 %v166, 92
    %v176 = vpop.permute.xlu0 %175
    %177 = vrot.lane.b32.xlu0 %v167, 92
    %v178 = vpop.permute.xlu0 %177
    %179 = vrot.lane.b32.xlu0 %v168, 92
    %v180 = vpop.permute.xlu0 %179
    %vm181 = vcmask 752640
    %v182 = vsel %vm181, %v174, %v176
    %v183 = vsel %vm181, %v176, %v178
    %v184 = vsel %vm181, %v178, %v180
    %188 = vst [vmem:[#allocation2 + $0x120] sm:$0xff] %v182
    %189 = vst [vmem:[#allocation2 + $0x128] sm:$0xff] %v183
    %190 = vst [vmem:[#allocation2 + $0x130] sm:$0xff] %v184
    %v191 = vld [vmem:[#allocation3] sm:$0xff]
    %v192 = vld [vmem:[#allocation3 + $0x8] sm:$0xff]
    %v193 = vld [vmem:[#allocation3 + $0x10] sm:$0xff]
    %v194 = vld [vmem:[#allocation3 + $0x18] sm:$0xff]
    %199 = vrot.lane.b32.xlu0 %v191, 91
    %v200 = vpop.permute.xlu0 %199
    %201 = vrot.lane.b32.xlu0 %v192, 91
    %v202 = vpop.permute.xlu0 %201
    %203 = vrot.lane.b32.xlu0 %v193, 91
    %v204 = vpop.permute.xlu0 %203
    %205 = vrot.lane.b32.xlu0 %v194, 91
    %v206 = vpop.permute.xlu0 %205
    %vm207 = vcmask 744448
    %v208 = vsel %vm207, %v200, %v202
    %v209 = vsel %vm207, %v202, %v204
    %v210 = vsel %vm207, %v204, %v206
    %214 = vst [vmem:[#allocation2 + $0x150] sm:$0xff] %v208
    %215 = vst [vmem:[#allocation2 + $0x158] sm:$0xff] %v209
    %216 = vst [vmem:[#allocation2 + $0x160] sm:$0xff] %v210
    %v217 = vld [vmem:[#allocation3] sm:$0xff]
    %v218 = vld [vmem:[#allocation3 + $0x8] sm:$0xff]
    %v219 = vld [vmem:[#allocation3 + $0x10] sm:$0xff]
    %v220 = vld [vmem:[#allocation3 + $0x18] sm:$0xff]
    %225 = vrot.lane.b32.xlu0 %v217, 90
    %v226 = vpop.permute.xlu0 %225
    %227 = vrot.lane.b32.xlu0 %v218, 90
    %v228 = vpop.permute.xlu0 %227
    %229 = vrot.lane.b32.xlu0 %v219, 90
    %v230 = vpop.permute.xlu0 %229
    %231 = vrot.lane.b32.xlu0 %v220, 90
    %v232 = vpop.permute.xlu0 %231
    %vm233 = vcmask 736256
    %v234 = vsel %vm233, %v226, %v228
    %v235 = vsel %vm233, %v228, %v230
    %v236 = vsel %vm233, %v230, %v232
    %240 = vst [vmem:[#allocation2 + $0x180] sm:$0xff] %v234
    %241 = vst [vmem:[#allocation2 + $0x188] sm:$0xff] %v235
    %242 = vst [vmem:[#allocation2 + $0x190] sm:$0xff] %v236
    %s243 = scalar_lea.vmem [#allocation3], 32
    %v244 = vld [vmem:[%s243] sm:$0xff]
    %v245 = vld [vmem:[%s243 + $0x8] sm:$0xff]
    %v246 = vld [vmem:[%s243 + $0x10] sm:$0xff]
    %247 = vst [vmem:[#allocation2 + $0x18] sm:$0xff] %v244
    %248 = vst [vmem:[#allocation2 + $0x20] sm:$0xff] %v245
    %249 = vst [vmem:[#allocation2 + $0x28] sm:$0xff] %v246
    %v250 = vld [vmem:[%s243] sm:$0xff]
    %v251 = vld [vmem:[%s243 + $0x8] sm:$0xff]
    %v252 = vld [vmem:[%s243 + $0x10] sm:$0xff]
    %v253 = vld [vmem:[%s243 + $0x18] sm:$0xff]
    %258 = vrot.lane.b32.xlu0 %v250, 127
    %v259 = vpop.permute.xlu0 %258
    %260 = vrot.lane.b32.xlu0 %v251, 127
    %v261 = vpop.permute.xlu0 %260
    %262 = vrot.lane.b32.xlu0 %v252, 127
    %v263 = vpop.permute.xlu0 %262
    %264 = vrot.lane.b32.xlu0 %v253, 127
    %v265 = vpop.permute.xlu0 %264
    %v266 = vsel %vm51, %v259, %v261
    %v267 = vsel %vm51, %v261, %v263
    %v268 = vsel %vm51, %v263, %v265
    %272 = vst [vmem:[#allocation2 + $0x48] sm:$0xff] %v266
    %273 = vst [vmem:[#allocation2 + $0x50] sm:$0xff] %v267
    %274 = vst [vmem:[#allocation2 + $0x58] sm:$0xff] %v268
    %v275 = vld [vmem:[%s243] sm:$0xff]
    %v276 = vld [vmem:[%s243 + $0x8] sm:$0xff]
    %v277 = vld [vmem:[%s243 + $0x10] sm:$0xff]
    %v278 = vld [vmem:[%s243 + $0x18] sm:$0xff]
    %283 = vrot.lane.b32.xlu0 %v275, 126
    %v284 = vpop.permute.xlu0 %283
    %285 = vrot.lane.b32.xlu0 %v276, 126
    %v286 = vpop.permute.xlu0 %285
    %287 = vrot.lane.b32.xlu0 %v277, 126
    %v288 = vpop.permute.xlu0 %287
    %289 = vrot.lane.b32.xlu0 %v278, 126
    %v290 = vpop.permute.xlu0 %289
    %v291 = vsel %vm77, %v284, %v286
    %v292 = vsel %vm77, %v286, %v288
    %v293 = vsel %vm77, %v288, %v290
    %297 = vst [vmem:[#allocation2 + $0x78] sm:$0xff] %v291
    %298 = vst [vmem:[#allocation2 + $0x80] sm:$0xff] %v292
    %299 = vst [vmem:[#allocation2 + $0x88] sm:$0xff] %v293
    %v300 = vld [vmem:[%s243] sm:$0xff]
    %v301 = vld [vmem:[%s243 + $0x8] sm:$0xff]
    %v302 = vld [vmem:[%s243 + $0x10] sm:$0xff]
    %v303 = vld [vmem:[%s243 + $0x18] sm:$0xff]
    %308 = vrot.lane.b32.xlu0 %v300, 110
    %v309 = vpop.permute.xlu0 %308
    %310 = vrot.lane.b32.xlu0 %v301, 110
    %v311 = vpop.permute.xlu0 %310
    %312 = vrot.lane.b32.xlu0 %v302, 110
    %v313 = vpop.permute.xlu0 %312
    %314 = vrot.lane.b32.xlu0 %v303, 110
    %v315 = vpop.permute.xlu0 %314
    %v316 = vsel %vm103, %v309, %v311
    %v317 = vsel %vm103, %v311, %v313
    %v318 = vsel %vm103, %v313, %v315
    %322 = vst [vmem:[#allocation2 + $0xa8] sm:$0xff] %v316
    %323 = vst [vmem:[#allocation2 + $0xb0] sm:$0xff] %v317
    %324 = vst [vmem:[#allocation2 + $0xb8] sm:$0xff] %v318
    %v325 = vld [vmem:[%s243] sm:$0xff]
    %v326 = vld [vmem:[%s243 + $0x8] sm:$0xff]
    %v327 = vld [vmem:[%s243 + $0x10] sm:$0xff]
    %v328 = vld [vmem:[%s243 + $0x18] sm:$0xff]
    %333 = vrot.lane.b32.xlu0 %v325, 109
    %v334 = vpop.permute.xlu0 %333
    %335 = vrot.lane.b32.xlu0 %v326, 109
    %v336 = vpop.permute.xlu0 %335
    %337 = vrot.lane.b32.xlu0 %v327, 109
    %v338 = vpop.permute.xlu0 %337
    %339 = vrot.lane.b32.xlu0 %v328, 109
    %v340 = vpop.permute.xlu0 %339
    %v341 = vsel %vm129, %v334, %v336
    %v342 = vsel %vm129, %v336, %v338
    %v343 = vsel %vm129, %v338, %v340
    %347 = vst [vmem:[#allocation2 + $0xd8] sm:$0xff] %v341
    %348 = vst [vmem:[#allocation2 + $0xe0] sm:$0xff] %v342
    %349 = vst [vmem:[#allocation2 + $0xe8] sm:$0xff] %v343
    %v350 = vld [vmem:[%s243] sm:$0xff]
    %v351 = vld [vmem:[%s243 + $0x8] sm:$0xff]
    %v352 = vld [vmem:[%s243 + $0x10] sm:$0xff]
    %v353 = vld [vmem:[%s243 + $0x18] sm:$0xff]
    %358 = vrot.lane.b32.xlu0 %v350, 108
    %v359 = vpop.permute.xlu0 %358
    %360 = vrot.lane.b32.xlu0 %v351, 108
    %v361 = vpop.permute.xlu0 %360
    %362 = vrot.lane.b32.xlu0 %v352, 108
    %v363 = vpop.permute.xlu0 %362
    %364 = vrot.lane.b32.xlu0 %v353, 108
    %v365 = vpop.permute.xlu0 %364
    %v366 = vsel %vm155, %v359, %v361
    %v367 = vsel %vm155, %v361, %v363
    %v368 = vsel %vm155, %v363, %v365
    %372 = vst [vmem:[#allocation2 + $0x108] sm:$0xff] %v366
    %373 = vst [vmem:[#allocation2 + $0x110] sm:$0xff] %v367
    %374 = vst [vmem:[#allocation2 + $0x118] sm:$0xff] %v368
    %v375 = vld [vmem:[%s243] sm:$0xff]
    %v376 = vld [vmem:[%s243 + $0x8] sm:$0xff]
    %v377 = vld [vmem:[%s243 + $0x10] sm:$0xff]
    %v378 = vld [vmem:[%s243 + $0x18] sm:$0xff]
    %383 = vrot.lane.b32.xlu0 %v375, 92
    %v384 = vpop.permute.xlu0 %383
    %385 = vrot.lane.b32.xlu0 %v376, 92
    %v386 = vpop.permute.xlu0 %385
    %387 = vrot.lane.b32.xlu0 %v377, 92
    %v388 = vpop.permute.xlu0 %387
    %389 = vrot.lane.b32.xlu0 %v378, 92
    %v390 = vpop.permute.xlu0 %389
    %v391 = vsel %vm181, %v384, %v386
    %v392 = vsel %vm181, %v386, %v388
    %v393 = vsel %vm181, %v388, %v390
    %397 = vst [vmem:[#allocation2 + $0x138] sm:$0xff] %v391
    %398 = vst [vmem:[#allocation2 + $0x140] sm:$0xff] %v392
    %399 = vst [vmem:[#allocation2 + $0x148] sm:$0xff] %v393
    %v400 = vld [vmem:[%s243] sm:$0xff]
    %v401 = vld [vmem:[%s243 + $0x8] sm:$0xff]
    %v402 = vld [vmem:[%s243 + $0x10] sm:$0xff]
    %v403 = vld [vmem:[%s243 + $0x18] sm:$0xff]
    %408 = vrot.lane.b32.xlu0 %v400, 91
    %v409 = vpop.permute.xlu0 %408
    %410 = vrot.lane.b32.xlu0 %v401, 91
    %v411 = vpop.permute.xlu0 %410
    %412 = vrot.lane.b32.xlu0 %v402, 91
    %v413 = vpop.permute.xlu0 %412
    %414 = vrot.lane.b32.xlu0 %v403, 91
    %v415 = vpop.permute.xlu0 %414
    %v416 = vsel %vm207, %v409, %v411
    %v417 = vsel %vm207, %v411, %v413
    %v418 = vsel %vm207, %v413, %v415
    %422 = vst [vmem:[#allocation2 + $0x168] sm:$0xff] %v416
    %423 = vst [vmem:[#allocation2 + $0x170] sm:$0xff] %v417
    %424 = vst [vmem:[#allocation2 + $0x178] sm:$0xff] %v418
    %v425 = vld [vmem:[%s243] sm:$0xff]
    %v426 = vld [vmem:[%s243 + $0x8] sm:$0xff]
    %v427 = vld [vmem:[%s243 + $0x10] sm:$0xff]
    %v428 = vld [vmem:[%s243 + $0x18] sm:$0xff]
    %433 = vrot.lane.b32.xlu0 %v425, 90
    %v434 = vpop.permute.xlu0 %433
    %435 = vrot.lane.b32.xlu0 %v426, 90
    %v436 = vpop.permute.xlu0 %435
    %437 = vrot.lane.b32.xlu0 %v427, 90
    %v438 = vpop.permute.xlu0 %437
    %439 = vrot.lane.b32.xlu0 %v428, 90
    %v440 = vpop.permute.xlu0 %439
    %v441 = vsel %vm233, %v434, %v436
    %v442 = vsel %vm233, %v436, %v438
    %v443 = vsel %vm233, %v438, %v440
    %447 = vst [vmem:[#allocation2 + $0x198] sm:$0xff] %v441
    %448 = vst [vmem:[#allocation2 + $0x1a0] sm:$0xff] %v442
    %449 = vst [vmem:[#allocation2 + $0x1a8] sm:$0xff] %v443
    %v450 = vld [vmem:[%s1] sm:$0xff]
    %v451 = vld [vmem:[#allocation2] sm:$0xff]
    %v452 = vld [vmem:[#allocation2 + $0x8] sm:$0xff]
    %v453 = vld [vmem:[#allocation2 + $0x10] sm:$0xff]
    %v454 = vld [vmem:[#allocation2 + $0x18] sm:$0xff]
    %v455 = vld [vmem:[#allocation2 + $0x20] sm:$0xff]
    %v456 = vld [vmem:[#allocation2 + $0x28] sm:$0xff]
    %v457 = vld [vmem:[#allocation2 + $0x30] sm:$0xff]
    %v458 = vld [vmem:[#allocation2 + $0x38] sm:$0xff]
    %v459 = vld [vmem:[#allocation2 + $0x40] sm:$0xff]
    %v460 = vld [vmem:[#allocation2 + $0x48] sm:$0xff]
    %v461 = vld [vmem:[#allocation2 + $0x50] sm:$0xff]
    %v462 = vld [vmem:[#allocation2 + $0x58] sm:$0xff]
    %v463 = vld [vmem:[#allocation2 + $0x60] sm:$0xff]
    %v464 = vld [vmem:[#allocation2 + $0x68] sm:$0xff]
    %v465 = vld [vmem:[#allocation2 + $0x70] sm:$0xff]
    %v466 = vld [vmem:[#allocation2 + $0x78] sm:$0xff]
    %v467 = vld [vmem:[#allocation2 + $0x80] sm:$0xff]
    %v468 = vld [vmem:[#allocation2 + $0x88] sm:$0xff]
    %v469 = vld [vmem:[#allocation2 + $0x90] sm:$0xff]
    %v470 = vld [vmem:[#allocation2 + $0x98] sm:$0xff]
    %v471 = vld [vmem:[#allocation2 + $0xa0] sm:$0xff]
    %v472 = vld [vmem:[#allocation2 + $0xa8] sm:$0xff]
    %v473 = vld [vmem:[#allocation2 + $0xb0] sm:$0xff]
    %v474 = vld [vmem:[#allocation2 + $0xb8] sm:$0xff]
    %v475 = vld [vmem:[#allocation2 + $0xc0] sm:$0xff]
    %v476 = vld [vmem:[#allocation2 + $0xc8] sm:$0xff]
    %v477 = vld [vmem:[#allocation2 + $0xd0] sm:$0xff]
    %v478 = vld [vmem:[#allocation2 + $0xd8] sm:$0xff]
    %v479 = vld [vmem:[#allocation2 + $0xe0] sm:$0xff]
    %v480 = vld [vmem:[#allocation2 + $0xe8] sm:$0xff]
    %v481 = vld [vmem:[#allocation2 + $0xf0] sm:$0xff]
    %v482 = vld [vmem:[#allocation2 + $0xf8] sm:$0xff]
    %v483 = vld [vmem:[#allocation2 + $0x100] sm:$0xff]
    %v484 = vld [vmem:[#allocation2 + $0x108] sm:$0xff]
    %v485 = vld [vmem:[#allocation2 + $0x110] sm:$0xff]
    %v486 = vld [vmem:[#allocation2 + $0x118] sm:$0xff]
    %v487 = vld [vmem:[#allocation2 + $0x120] sm:$0xff]
    %v488 = vld [vmem:[#allocation2 + $0x128] sm:$0xff]
    %v489 = vld [vmem:[#allocation2 + $0x130] sm:$0xff]
    %v490 = vld [vmem:[#allocation2 + $0x138] sm:$0xff]
    %v491 = vld [vmem:[#allocation2 + $0x140] sm:$0xff]
    %v492 = vld [vmem:[#allocation2 + $0x148] sm:$0xff]
    %v493 = vld [vmem:[#allocation2 + $0x150] sm:$0xff]
    %v494 = vld [vmem:[#allocation2 + $0x158] sm:$0xff]
    %v495 = vld [vmem:[#allocation2 + $0x160] sm:$0xff]
    %v496 = vld [vmem:[#allocation2 + $0x168] sm:$0xff]
    %v497 = vld [vmem:[#allocation2 + $0x170] sm:$0xff]
    %v498 = vld [vmem:[#allocation2 + $0x178] sm:$0xff]
    %v499 = vld [vmem:[#allocation2 + $0x180] sm:$0xff]
    %v500 = vld [vmem:[#allocation2 + $0x188] sm:$0xff]
    %v501 = vld [vmem:[#allocation2 + $0x190] sm:$0xff]
    %v502 = vld [vmem:[#allocation2 + $0x198] sm:$0xff]
    %v503 = vld [vmem:[#allocation2 + $0x1a0] sm:$0xff]
    %v504 = vld [vmem:[#allocation2 + $0x1a8] sm:$0xff]
    %v505 = vld [vmem:[%s2] sm:$0xff]
    %507 = vset.pattern.permute.xlu0 0
    %508 = vperm.xlu0 %507, %v505
    %v509 = vpop.permute.xlu0 %508
    %vm511 = vcmask 588800
    %v513 = vsel %vm511, %v450, 0
    %515 = vmatprep.subr.mxu0 0.0
    %516 = vmatpush1.msra.mxu0 0.0
    %517 = vmatprep.subr.mxu0 0.0
    %518 = vmatpush1.msra.mxu0 0.0
    %519 = vmatprep.subr.mxu0 0.0
    %520 = vmatpush1.msra.mxu0 0.0
    %521 = vmatprep.subr.mxu0 0.0
    %522 = vmatpush1.msra.mxu0 0.0
    %523 = vmatprep.subr.mxu0 0.0
    %524 = vmatpush1.msra.mxu0 0.0
    %525 = vmatprep.subr.mxu0 0.0
    %526 = vmatpush1.msra.mxu0 0.0
    %527 = vmatprep.subr.mxu0 0.0
    %528 = vmatpush1.msra.mxu0 0.0
    %529 = vmatprep.subr.mxu0 %v500
    %530 = vmatpush1.msra.mxu0 %v499
    %531 = vmatprep.subr.mxu0 %v494
    %532 = vmatpush1.msra.mxu0 %v493
    %533 = vmatprep.subr.mxu0 %v488
    %534 = vmatpush1.msra.mxu0 %v487
    %535 = vmatprep.subr.mxu0 %v482
    %536 = vmatpush1.msra.mxu0 %v481
    %537 = vmatprep.subr.mxu0 %v476
    %538 = vmatpush1.msra.mxu0 %v475
    %539 = vmatprep.subr.mxu0 %v470
    %540 = vmatpush1.msra.mxu0 %v469
    %541 = vmatprep.subr.mxu0 %v464
    %542 = vmatpush1.msra.mxu0 %v463
    %543 = vmatprep.subr.mxu0 %v458
    %544 = vmatpush1.msra.mxu0 %v457
    %545 = vmatprep.subr.mxu0 %v452
    %546 = vmatpush1.msra.mxu0 %v451
    %547 = vmatprep.subr.mxu0 0.0
    %548 = vmatpush2.msra.mxu0 0.0
    %549 = vmatprep.subr.mxu0 0.0
    %550 = vmatpush2.msra.mxu0 0.0
    %551 = vmatprep.subr.mxu0 0.0
    %552 = vmatpush2.msra.mxu0 0.0
    %553 = vmatprep.subr.mxu0 0.0
    %554 = vmatpush2.msra.mxu0 0.0
    %555 = vmatprep.subr.mxu0 0.0
    %556 = vmatpush2.msra.mxu0 0.0
    %557 = vmatprep.subr.mxu0 0.0
    %558 = vmatpush2.msra.mxu0 0.0
    %559 = vmatprep.subr.mxu0 0.0
    %560 = vmatpush2.msra.mxu0 0.0
    %561 = vmatprep.subr.mxu0 0.0
    %562 = vmatpush2.msra.mxu0 0.0
    %563 = vmatprep.subr.mxu0 0.0
    %564 = vmatpush2.msra.mxu0 0.0
    %565 = vmatprep.subr.mxu0 0.0
    %566 = vmatpush2.msra.mxu0 0.0
    %567 = vmatprep.subr.mxu0 0.0
    %568 = vmatpush2.msra.mxu0 0.0
    %569 = vmatprep.subr.mxu0 0.0
    %570 = vmatpush2.msra.mxu0 0.0
    %571 = vmatprep.subr.mxu0 0.0
    %572 = vmatpush2.msra.mxu0 0.0
    %573 = vmatprep.subr.mxu0 0.0
    %574 = vmatpush2.msra.mxu0 0.0
    %575 = vmatprep.subr.mxu0 0.0
    %576 = vmatpush2.msra.mxu0 0.0
    %577 = vmatprep.subr.mxu0 0.0
    %578 = vmatpush2.msra.mxu0 0.0
    %579 = vmatprep.mubr.f32.mxu0 0.0
    %580 = vmatmul.mubr.f32.gmra.mxu0 %v513
    %v581 = vpop.f32.mrf.mxu0
    %v582 = vadd.f32 %v509, %v581
    %v583 = vpop.f32.mrf.mxu0
    %v584 = vadd.f32 %v509, %v583
    %585 = vdwg.mxu0
    %586 = vmatprep.subr.mxu0 0.0
    %587 = vmatpush1.msra.mxu0 0.0
    %588 = vmatprep.subr.mxu0 0.0
    %589 = vmatpush1.msra.mxu0 0.0
    %590 = vmatprep.subr.mxu0 0.0
    %591 = vmatpush1.msra.mxu0 0.0
    %592 = vmatprep.subr.mxu0 0.0
    %593 = vmatpush1.msra.mxu0 0.0
    %594 = vmatprep.subr.mxu0 0.0
    %595 = vmatpush1.msra.mxu0 0.0
    %596 = vmatprep.subr.mxu0 0.0
    %597 = vmatpush1.msra.mxu0 0.0
    %598 = vmatprep.subr.mxu0 0.0
    %599 = vmatpush1.msra.mxu0 0.0
    %600 = vmatprep.subr.mxu0 %v502
    %601 = vmatpush1.msra.mxu0 %v501
    %602 = vmatprep.subr.mxu0 %v496
    %603 = vmatpush1.msra.mxu0 %v495
    %604 = vmatprep.subr.mxu0 %v490
    %605 = vmatpush1.msra.mxu0 %v489
    %606 = vmatprep.subr.mxu0 %v484
    %607 = vmatpush1.msra.mxu0 %v483
    %608 = vmatprep.subr.mxu0 %v478
    %609 = vmatpush1.msra.mxu0 %v477
    %610 = vmatprep.subr.mxu0 %v472
    %611 = vmatpush1.msra.mxu0 %v471
    %612 = vmatprep.subr.mxu0 %v466
    %613 = vmatpush1.msra.mxu0 %v465
    %614 = vmatprep.subr.mxu0 %v460
    %615 = vmatpush1.msra.mxu0 %v459
    %616 = vmatprep.subr.mxu0 %v454
    %617 = vmatpush1.msra.mxu0 %v453
    %618 = vmatprep.subr.mxu0 0.0
    %619 = vmatpush2.msra.mxu0 0.0
    %620 = vmatprep.subr.mxu0 0.0
    %621 = vmatpush2.msra.mxu0 0.0
    %622 = vmatprep.subr.mxu0 0.0
    %623 = vmatpush2.msra.mxu0 0.0
    %624 = vmatprep.subr.mxu0 0.0
    %625 = vmatpush2.msra.mxu0 0.0
    %626 = vmatprep.subr.mxu0 0.0
    %627 = vmatpush2.msra.mxu0 0.0
    %628 = vmatprep.subr.mxu0 0.0
    %629 = vmatpush2.msra.mxu0 0.0
    %630 = vmatprep.subr.mxu0 0.0
    %631 = vmatpush2.msra.mxu0 0.0
    %632 = vmatprep.subr.mxu0 0.0
    %633 = vmatpush2.msra.mxu0 0.0
    %634 = vmatprep.subr.mxu0 0.0
    %635 = vmatpush2.msra.mxu0 0.0
    %636 = vmatprep.subr.mxu0 0.0
    %637 = vmatpush2.msra.mxu0 0.0
    %638 = vmatprep.subr.mxu0 0.0
    %639 = vmatpush2.msra.mxu0 0.0
    %640 = vmatprep.subr.mxu0 0.0
    %641 = vmatpush2.msra.mxu0 0.0
    %642 = vmatprep.subr.mxu0 0.0
    %643 = vmatpush2.msra.mxu0 0.0
    %644 = vmatprep.subr.mxu0 0.0
    %645 = vmatpush2.msra.mxu0 0.0
    %646 = vmatprep.subr.mxu0 0.0
    %647 = vmatpush2.msra.mxu0 0.0
    %648 = vmatprep.subr.mxu0 0.0
    %649 = vmatpush2.msra.mxu0 0.0
    %650 = vmatprep.mubr.f32.mxu0 0.0
    %651 = vmatmul.mubr.f32.gmra.mxu0 %v513
    %v652 = vpop.f32.mrf.mxu0
    %v653 = vadd.f32 %v509, %v652
    %v654 = vpop.f32.mrf.mxu0
    %v655 = vadd.f32 %v509, %v654
    %656 = vdwg.mxu0
    %657 = vmatprep.subr.mxu0 0.0
    %658 = vmatpush1.msra.mxu0 0.0
    %659 = vmatprep.subr.mxu0 0.0
    %660 = vmatpush1.msra.mxu0 0.0
    %661 = vmatprep.subr.mxu0 0.0
    %662 = vmatpush1.msra.mxu0 0.0
    %663 = vmatprep.subr.mxu0 0.0
    %664 = vmatpush1.msra.mxu0 0.0
    %665 = vmatprep.subr.mxu0 0.0
    %666 = vmatpush1.msra.mxu0 0.0
    %667 = vmatprep.subr.mxu0 0.0
    %668 = vmatpush1.msra.mxu0 0.0
    %669 = vmatprep.subr.mxu0 0.0
    %670 = vmatpush1.msra.mxu0 0.0
    %671 = vmatprep.subr.mxu0 %v504
    %672 = vmatpush1.msra.mxu0 %v503
    %673 = vmatprep.subr.mxu0 %v498
    %674 = vmatpush1.msra.mxu0 %v497
    %675 = vmatprep.subr.mxu0 %v492
    %676 = vmatpush1.msra.mxu0 %v491
    %677 = vmatprep.subr.mxu0 %v486
    %678 = vmatpush1.msra.mxu0 %v485
    %679 = vmatprep.subr.mxu0 %v480
    %680 = vmatpush1.msra.mxu0 %v479
    %681 = vmatprep.subr.mxu0 %v474
    %682 = vmatpush1.msra.mxu0 %v473
    %683 = vmatprep.subr.mxu0 %v468
    %684 = vmatpush1.msra.mxu0 %v467
    %685 = vmatprep.subr.mxu0 %v462
    %686 = vmatpush1.msra.mxu0 %v461
    %687 = vmatprep.subr.mxu0 %v456
    %688 = vmatpush1.msra.mxu0 %v455
    %689 = vmatprep.subr.mxu0 0.0
    %690 = vmatpush2.msra.mxu0 0.0
    %691 = vmatprep.subr.mxu0 0.0
    %692 = vmatpush2.msra.mxu0 0.0
    %693 = vmatprep.subr.mxu0 0.0
    %694 = vmatpush2.msra.mxu0 0.0
    %695 = vmatprep.subr.mxu0 0.0
    %696 = vmatpush2.msra.mxu0 0.0
    %697 = vmatprep.subr.mxu0 0.0
    %698 = vmatpush2.msra.mxu0 0.0
    %699 = vmatprep.subr.mxu0 0.0
    %700 = vmatpush2.msra.mxu0 0.0
    %701 = vmatprep.subr.mxu0 0.0
    %702 = vmatpush2.msra.mxu0 0.0
    %703 = vmatprep.subr.mxu0 0.0
    %704 = vmatpush2.msra.mxu0 0.0
    %705 = vmatprep.subr.mxu0 0.0
    %706 = vmatpush2.msra.mxu0 0.0
    %707 = vmatprep.subr.mxu0 0.0
    %708 = vmatpush2.msra.mxu0 0.0
    %709 = vmatprep.subr.mxu0 0.0
    %710 = vmatpush2.msra.mxu0 0.0
    %711 = vmatprep.subr.mxu0 0.0
    %712 = vmatpush2.msra.mxu0 0.0
    %713 = vmatprep.subr.mxu0 0.0
    %714 = vmatpush2.msra.mxu0 0.0
    %715 = vmatprep.subr.mxu0 0.0
    %716 = vmatpush2.msra.mxu0 0.0
    %717 = vmatprep.subr.mxu0 0.0
    %718 = vmatpush2.msra.mxu0 0.0
    %719 = vmatprep.subr.mxu0 0.0
    %720 = vmatpush2.msra.mxu0 0.0
    %721 = vmatprep.mubr.f32.mxu0 0.0
    %722 = vmatmul.mubr.f32.gmra.mxu0 %v513
    %v723 = vpop.f32.mrf.mxu0
    %v724 = vadd.f32 %v509, %v723
    %v725 = vpop.f32.mrf.mxu0
    %v726 = vadd.f32 %v509, %v725
    %727 = vdwg.mxu0
    %728 = vst [vmem:[#allocation6] sm:$0xff] %v582
    %729 = vst [vmem:[#allocation6 + $0x8] sm:$0xff] %v584
    %730 = vst [vmem:[#allocation6 + $0x10] sm:$0xff] %v653
    %s731 = scalar_lea.vmem [#allocation6], 24
    %732 = vst [vmem:[%s731] sm:$0xff] %v655
    %733 = vst [vmem:[%s731 + $0x8] sm:$0xff] %v724
    %734 = vst [vmem:[%s731 + $0x10] sm:$0xff] %v726
    // Predicated region
    $region18: #{tpu_custom_call.1} parent=1 // pred_check
      _
    $region19: #{tpu_custom_call.1} parent=1 // pred_check_branch
      %736 = sbr.rel (0) target = $region21
    $region20: #{tpu_custom_call.1} parent=1 // pred_region
      %s738 = ssub.s32 768, 768
      %739 = vsyncadd [#allocation5], %s738
      %s740 = sshll.u32 [#allocation6], 4
      %s741 = int_to_ptr.vmem [resolvable:$true] %s740
      %746 = dma.vmem_to_hbm [thread:$0]  %s741, 768, %s3, [#allocation5], 384, 384, 24
    $region21: #{tpu_custom_call.1} parent=1 // pred_fallthru
      _
    // Predicated region
    $region22: #{tpu_custom_call.1} parent=1 // pred_check
      _
    $region23: #{tpu_custom_call.1} parent=1 // pred_check_branch
      %748 = sbr.rel (0) target = $region25
    $region24: #{tpu_custom_call.1} parent=1 // pred_region
      %749 = dma.done [#allocation5], 768
    $region25: #{tpu_custom_call.1} parent=1 // pred_fallthru
      _
    %750 = vsyncpa [#allocation4], 1
    %751 = vsyncpa [#allocation5], 1

</llo_original>
